<compile_context>
chip_gen: v6e
topology: v6e:2x2x1
jax: 0.10.0
libtpu: 0.0.40
codegen_flags: <defaults>
</compile_context>

<pallas_src>
import functools

import jax
import jax.numpy as jnp
from jax.experimental import pallas as pl
from jax.experimental.pallas import tpu as pltpu

EPS = 1e-5
MOMENTUM = 0.9          # new = momentum * old + (1 - momentum) * batch (as in the module)


# ---------------------------------------------------------------------------
# Pass 1: per-channel sum / sum-of-squares over (N, H*W); finalize to
#         scale = gamma * rsqrt(var + eps), shift = beta - mean * scale,
#         plus the moving-average updates.
# ---------------------------------------------------------------------------
def _bn_stats_kernel(x_ref, gamma_ref, beta_ref, mm_ref, mv_ref,
                     scale_ref, shift_ref, new_mm_ref, new_mv_ref,
                     sum_sc, sq_sc, *, inv_m):
    i = pl.program_id(0)
    j = pl.program_id(1)

    @pl.when(jnp.logical_and(i == 0, j == 0))
    def _init():
        sum_sc[...] = jnp.zeros_like(sum_sc)
        sq_sc[...] = jnp.zeros_like(sq_sc)

    x = x_ref[...].astype(jnp.float32)              # (1, C, T)
    sum_sc[...] += jnp.sum(x, axis=2)               # (1, C)  lane-axis reduce (XLU)
    sq_sc[...] += jnp.sum(x * x, axis=2)            # (1, C)

    is_last = jnp.logical_and(i == pl.num_programs(0) - 1,
                              j == pl.num_programs(1) - 1)

    @pl.when(is_last)
    def _finalize():
        mean = sum_sc[...] * inv_m                              # (1, C)
        var = jnp.maximum(sq_sc[...] * inv_m - mean * mean, 0.0)  # biased, like torch .mean()
        inv_std = jax.lax.rsqrt(var + EPS)
        scale = gamma_ref[...] * inv_std
        scale_ref[...] = scale
        shift_ref[...] = beta_ref[...] - mean * scale
        new_mm_ref[...] = MOMENTUM * mm_ref[...] + (1.0 - MOMENTUM) * mean
        new_mv_ref[...] = MOMENTUM * mv_ref[...] + (1.0 - MOMENTUM) * var


# ---------------------------------------------------------------------------
# Pass 2: y = x * scale[c] + shift[c]   (lane-dense FMA per tile)
# ---------------------------------------------------------------------------
def _bn_norm_kernel(x_ref, scale_ref, shift_ref, y_ref):
    x = x_ref[...].astype(jnp.float32)              # (1, C, T)
    scale = scale_ref[...][:, :, None]              # (1, C, 1)
    shift = shift_ref[...][:, :, None]
    y_ref[...] = (x * scale + shift).astype(y_ref.dtype)


def _pick_hw_tile(hw, c, itemsize, max_tile_bytes=2 << 20):
    """Largest lane tile that is a multiple of 128, divides hw, ~<= max_tile_bytes."""
    if hw % 128 != 0:
        return hw                      # fall back to full extent (block dim == array dim)
    max_t = max(128, (max_tile_bytes // (c * itemsize)) // 128 * 128)
    t = min(hw, max_t)
    while t >= 128:
        if hw % t == 0:
            return t
        t -= 128
    return hw


def batch_norm_pallas(x_nchw, gamma, beta, moving_mean, moving_var):
    """Training-mode batch norm for 4-D NCHW input.

    gamma/beta/moving_mean/moving_var have shape (1, C, 1, 1) like the PyTorch
    module. Returns (Y_nchw, new_moving_mean, new_moving_var).
    """
    N, C, H, W = x_nchw.shape
    HW = H * W
    M = N * HW

    # Free views: native NCHW layout with H*W on the lane axis.
    x3d = x_nchw.reshape(N, C, HW)
    g2d = gamma.reshape(1, C).astype(jnp.float32)
    b2d = beta.reshape(1, C).astype(jnp.float32)
    mm2d = moving_mean.reshape(1, C).astype(jnp.float32)
    mv2d = moving_var.reshape(1, C).astype(jnp.float32)

    itemsize = jnp.dtype(x_nchw.dtype).itemsize
    hw_tile = _pick_hw_tile(HW, C, itemsize)
    grid = (N, HW // hw_tile)

    x_spec = pl.BlockSpec((1, C, hw_tile), lambda i, j: (i, 0, j))
    vec_spec = pl.BlockSpec((1, C), lambda i, j: (0, 0))
    vec_out = jax.ShapeDtypeStruct((1, C), jnp.float32)

    vmem_limit = 32 * 1024 * 1024  # safe on v5e/v6e (128 MiB phys) and v7x (64 MiB phys)

    # ---- pass 1: statistics (reduction -> both grid axes "arbitrary") ----
    scale, shift, new_mm, new_mv = pl.pallas_call(
        functools.partial(_bn_stats_kernel, inv_m=1.0 / M),
        grid_spec=pltpu.PrefetchScalarGridSpec(
            num_scalar_prefetch=0,
            grid=grid,
            in_specs=[x_spec, vec_spec, vec_spec, vec_spec, vec_spec],
            out_specs=(vec_spec, vec_spec, vec_spec, vec_spec),
            scratch_shapes=[pltpu.VMEM((1, C), jnp.float32),
                            pltpu.VMEM((1, C), jnp.float32)]),
        out_shape=(vec_out, vec_out, vec_out, vec_out),
        compiler_params=pltpu.CompilerParams(
            dimension_semantics=("arbitrary", "arbitrary"),
            vmem_limit_bytes=vmem_limit),
    )(x3d, g2d, b2d, mm2d, mv2d)

    # ---- pass 2: normalize (independent tiles -> "parallel" for megacore) ----
    y3d = pl.pallas_call(
        _bn_norm_kernel,
        grid_spec=pltpu.PrefetchScalarGridSpec(
            num_scalar_prefetch=0,
            grid=grid,
            in_specs=[x_spec, vec_spec, vec_spec],
            out_specs=pl.BlockSpec((1, C, hw_tile), lambda i, j: (i, 0, j))),
        out_shape=jax.ShapeDtypeStruct((N, C, HW), x_nchw.dtype),
        compiler_params=pltpu.CompilerParams(
            dimension_semantics=("parallel", "parallel"),
            vmem_limit_bytes=vmem_limit),
    )(x3d, scale, shift)

    y_nchw = y3d.reshape(N, C, H, W)
    return (y_nchw,
            new_mm.reshape(1, C, 1, 1),
            new_mv.reshape(1, C, 1, 1))


def batch_norm_reference(x, gamma, beta, moving_mean, moving_var):
    mean = jnp.mean(x, axis=(0, 2, 3), keepdims=True)
    var = jnp.mean((x - mean) ** 2, axis=(0, 2, 3), keepdims=True)
    x_hat = (x - mean) / jnp.sqrt(var + EPS)
    y = gamma * x_hat + beta
    new_mm = MOMENTUM * moving_mean + (1.0 - MOMENTUM) * mean
    new_mv = MOMENTUM * moving_var + (1.0 - MOMENTUM) * var
    return y, new_mm, new_mv


if __name__ == "__main__":
    # Module config: BatchNorm(num_features=4, num_dims=4)
    N, C, H, W = 2, 4, 16, 16

    key = jax.random.PRNGKey(0)
    x = jax.random.normal(key, (N, C, H, W), dtype=jnp.float32)

    # Deterministic parameter init, matching __init__.
    gamma = jnp.ones((1, C, 1, 1), jnp.float32)
    beta = jnp.zeros((1, C, 1, 1), jnp.float32)
    moving_mean = jnp.zeros((1, C, 1, 1), jnp.float32)
    moving_var = jnp.ones((1, C, 1, 1), jnp.float32)

    y, new_mm, new_mv = batch_norm_pallas(x, gamma, beta, moving_mean, moving_var)
    jax.block_until_ready((y, new_mm, new_mv))

    y_ref, mm_ref, mv_ref = batch_norm_reference(x, gamma, beta, moving_mean, moving_var)
    assert jnp.allclose(y, y_ref, atol=1e-5, rtol=1e-5)
    assert jnp.allclose(new_mm, mm_ref, atol=1e-6, rtol=1e-6)
    assert jnp.allclose(new_mv, mv_ref, atol=1e-6, rtol=1e-6)

    print("KERNEL_OK")
</pallas_src>

<mosaic_0001>
module attributes {stable_mosaic.version = 11 : i64} {
  func.func @_bn_stats_kernel(%arg0: i32, %arg1: i32, %arg2: memref<1x4x256xf32, #tpu.memory_space<vmem>>, %arg3: memref<1x4xf32, #tpu.memory_space<vmem>>, %arg4: memref<1x4xf32, #tpu.memory_space<vmem>>, %arg5: memref<1x4xf32, #tpu.memory_space<vmem>>, %arg6: memref<1x4xf32, #tpu.memory_space<vmem>>, %arg7: memref<1x4xf32, #tpu.memory_space<vmem>>, %arg8: memref<1x4xf32, #tpu.memory_space<vmem>>, %arg9: memref<1x4xf32, #tpu.memory_space<vmem>>, %arg10: memref<1x4xf32, #tpu.memory_space<vmem>>, %arg11: memref<1x4xf32, #tpu.memory_space<vmem>>, %arg12: memref<1x4xf32, #tpu.memory_space<vmem>>) attributes {dimension_semantics = [#tpu.dimension_semantics<arbitrary>, #tpu.dimension_semantics<arbitrary>], iteration_bounds = array<i64: 2, 1>, scalar_prefetch = 0 : i64, scratch_operands = 2 : i64, tpu.core_type = #tpu.core_type<tc>, window_params = [{transform_indices = @transform_0, window_bounds = array<i64: 1, 4, 256>}, {pipeline_mode = #tpu.pipeline_mode<synchronous>, transform_indices = @transform_1, window_bounds = array<i64: 1, 4>}, {pipeline_mode = #tpu.pipeline_mode<synchronous>, transform_indices = @transform_2, window_bounds = array<i64: 1, 4>}, {pipeline_mode = #tpu.pipeline_mode<synchronous>, transform_indices = @transform_3, window_bounds = array<i64: 1, 4>}, {pipeline_mode = #tpu.pipeline_mode<synchronous>, transform_indices = @transform_4, window_bounds = array<i64: 1, 4>}, {pipeline_mode = #tpu.pipeline_mode<synchronous>, transform_indices = @transform_5, window_bounds = array<i64: 1, 4>}, {pipeline_mode = #tpu.pipeline_mode<synchronous>, transform_indices = @transform_6, window_bounds = array<i64: 1, 4>}, {pipeline_mode = #tpu.pipeline_mode<synchronous>, transform_indices = @transform_7, window_bounds = array<i64: 1, 4>}, {pipeline_mode = #tpu.pipeline_mode<synchronous>, transform_indices = @transform_8, window_bounds = array<i64: 1, 4>}]} {
    %c0_i32 = arith.constant 0 : i32
    %0 = arith.cmpi eq, %arg0, %c0_i32 : i32
    %c0_i32_0 = arith.constant 0 : i32
    %1 = arith.cmpi eq, %arg1, %c0_i32_0 : i32
    %2 = arith.andi %0, %1 : i1
    %3 = arith.extui %2 : i1 to i32
    %c0_i32_1 = arith.constant 0 : i32
    %4 = arith.cmpi ne, %3, %c0_i32_1 : i32
    scf.if %4 {
      %cst_15 = arith.constant 0.000000e+00 : f32
      %20 = vector.broadcast %cst_15 : f32 to vector<1x4xf32>
      %c0_16 = arith.constant 0 : index
      %c0_17 = arith.constant 0 : index
      %21 = vector.load %arg11[%c0_16, %c0_17] : memref<1x4xf32, #tpu.memory_space<vmem>>, vector<1x4xf32>
      tpu.vector_store %arg11[%c0_16, %c0_17], %20 {strides = array<i32>} : memref<1x4xf32, #tpu.memory_space<vmem>>, vector<1x4xf32>,
      %cst_18 = arith.constant 0.000000e+00 : f32
      %22 = vector.broadcast %cst_18 : f32 to vector<1x4xf32>
      %c0_19 = arith.constant 0 : index
      %c0_20 = arith.constant 0 : index
      %23 = vector.load %arg12[%c0_19, %c0_20] : memref<1x4xf32, #tpu.memory_space<vmem>>, vector<1x4xf32>
      tpu.vector_store %arg12[%c0_19, %c0_20], %22 {strides = array<i32>} : memref<1x4xf32, #tpu.memory_space<vmem>>, vector<1x4xf32>,
    } else {
    }
    %c0 = arith.constant 0 : index
    %c0_2 = arith.constant 0 : index
    %c0_3 = arith.constant 0 : index
    %5 = vector.load %arg2[%c0, %c0_2, %c0_3] : memref<1x4x256xf32, #tpu.memory_space<vmem>>, vector<1x4x256xf32>
    %c0_4 = arith.constant 0 : index
    %c0_5 = arith.constant 0 : index
    %6 = vector.load %arg11[%c0_4, %c0_5] : memref<1x4xf32, #tpu.memory_space<vmem>>, vector<1x4xf32>
    %cst = arith.constant dense<0.000000e+00> : vector<1x4xf32>
    %7 = vector.multi_reduction <add>, %5, %cst [2] : vector<1x4x256xf32> to vector<1x4xf32>
    %8 = arith.addf %6, %7 : vector<1x4xf32>
    %c0_6 = arith.constant 0 : index
    %c0_7 = arith.constant 0 : index
    %9 = vector.load %arg11[%c0_6, %c0_7] : memref<1x4xf32, #tpu.memory_space<vmem>>, vector<1x4xf32>
    tpu.vector_store %arg11[%c0_6, %c0_7], %8 {strides = array<i32>} : memref<1x4xf32, #tpu.memory_space<vmem>>, vector<1x4xf32>,
    %c0_8 = arith.constant 0 : index
    %c0_9 = arith.constant 0 : index
    %10 = vector.load %arg12[%c0_8, %c0_9] : memref<1x4xf32, #tpu.memory_space<vmem>>, vector<1x4xf32>
    %11 = arith.mulf %5, %5 : vector<1x4x256xf32>
    %cst_10 = arith.constant dense<0.000000e+00> : vector<1x4xf32>
    %12 = vector.multi_reduction <add>, %11, %cst_10 [2] : vector<1x4x256xf32> to vector<1x4xf32>
    %13 = arith.addf %10, %12 : vector<1x4xf32>
    %c0_11 = arith.constant 0 : index
    %c0_12 = arith.constant 0 : index
    %14 = vector.load %arg12[%c0_11, %c0_12] : memref<1x4xf32, #tpu.memory_space<vmem>>, vector<1x4xf32>
    tpu.vector_store %arg12[%c0_11, %c0_12], %13 {strides = array<i32>} : memref<1x4xf32, #tpu.memory_space<vmem>>, vector<1x4xf32>,
    %c1_i32 = arith.constant 1 : i32
    %15 = arith.cmpi eq, %arg0, %c1_i32 : i32
    %c0_i32_13 = arith.constant 0 : i32
    %16 = arith.cmpi eq, %arg1, %c0_i32_13 : i32
    %17 = arith.andi %15, %16 : i1
    %18 = arith.extui %17 : i1 to i32
    %c0_i32_14 = arith.constant 0 : i32
    %19 = arith.cmpi ne, %18, %c0_i32_14 : i32
    scf.if %19 {
      %c0_15 = arith.constant 0 : index
      %c0_16 = arith.constant 0 : index
      %20 = vector.load %arg11[%c0_15, %c0_16] : memref<1x4xf32, #tpu.memory_space<vmem>>, vector<1x4xf32>
      %cst_17 = arith.constant 0.001953125 : f32
      %21 = vector.broadcast %cst_17 : f32 to vector<1x4xf32>
      %22 = arith.mulf %20, %21 : vector<1x4xf32>
      %c0_18 = arith.constant 0 : index
      %c0_19 = arith.constant 0 : index
      %23 = vector.load %arg12[%c0_18, %c0_19] : memref<1x4xf32, #tpu.memory_space<vmem>>, vector<1x4xf32>
      %cst_20 = arith.constant 0.001953125 : f32
      %24 = vector.broadcast %cst_20 : f32 to vector<1x4xf32>
      %25 = arith.mulf %23, %24 : vector<1x4xf32>
      %26 = arith.mulf %22, %22 : vector<1x4xf32>
      %27 = arith.subf %25, %26 : vector<1x4xf32>
      %cst_21 = arith.constant 0.000000e+00 : f32
      %28 = vector.broadcast %cst_21 : f32 to vector<1x4xf32>
      %29 = arith.maximumf %27, %28 : vector<1x4xf32>
      %cst_22 = arith.constant 9.99999974E-6 : f32
      %30 = vector.broadcast %cst_22 : f32 to vector<1x4xf32>
      %31 = arith.addf %29, %30 : vector<1x4xf32>
      %32 = math.rsqrt %31 : vector<1x4xf32>
      %c0_23 = arith.constant 0 : index
      %c0_24 = arith.constant 0 : index
      %33 = vector.load %arg3[%c0_23, %c0_24] : memref<1x4xf32, #tpu.memory_space<vmem>>, vector<1x4xf32>
      %34 = arith.mulf %33, %32 : vector<1x4xf32>
      %c0_25 = arith.constant 0 : index
      %c0_26 = arith.constant 0 : index
      %35 = vector.load %arg7[%c0_25, %c0_26] : memref<1x4xf32, #tpu.memory_space<vmem>>, vector<1x4xf32>
      tpu.vector_store %arg7[%c0_25, %c0_26], %34 {strides = array<i32>} : memref<1x4xf32, #tpu.memory_space<vmem>>, vector<1x4xf32>,
      %c0_27 = arith.constant 0 : index
      %c0_28 = arith.constant 0 : index
      %36 = vector.load %arg4[%c0_27, %c0_28] : memref<1x4xf32, #tpu.memory_space<vmem>>, vector<1x4xf32>
      %37 = arith.mulf %22, %34 : vector<1x4xf32>
      %38 = arith.subf %36, %37 : vector<1x4xf32>
      %c0_29 = arith.constant 0 : index
      %c0_30 = arith.constant 0 : index
      %39 = vector.load %arg8[%c0_29, %c0_30] : memref<1x4xf32, #tpu.memory_space<vmem>>, vector<1x4xf32>
      tpu.vector_store %arg8[%c0_29, %c0_30], %38 {strides = array<i32>} : memref<1x4xf32, #tpu.memory_space<vmem>>, vector<1x4xf32>,
      %c0_31 = arith.constant 0 : index
      %c0_32 = arith.constant 0 : index
      %40 = vector.load %arg5[%c0_31, %c0_32] : memref<1x4xf32, #tpu.memory_space<vmem>>, vector<1x4xf32>
      %cst_33 = arith.constant 0.899999976 : f32
      %41 = vector.broadcast %cst_33 : f32 to vector<1x4xf32>
      %42 = arith.mulf %41, %40 : vector<1x4xf32>
      %cst_34 = arith.constant 1.000000e-01 : f32
      %43 = vector.broadcast %cst_34 : f32 to vector<1x4xf32>
      %44 = arith.mulf %43, %22 : vector<1x4xf32>
      %45 = arith.addf %42, %44 : vector<1x4xf32>
      %c0_35 = arith.constant 0 : index
      %c0_36 = arith.constant 0 : index
      %46 = vector.load %arg9[%c0_35, %c0_36] : memref<1x4xf32, #tpu.memory_space<vmem>>, vector<1x4xf32>
      tpu.vector_store %arg9[%c0_35, %c0_36], %45 {strides = array<i32>} : memref<1x4xf32, #tpu.memory_space<vmem>>, vector<1x4xf32>,
      %c0_37 = arith.constant 0 : index
      %c0_38 = arith.constant 0 : index
      %47 = vector.load %arg6[%c0_37, %c0_38] : memref<1x4xf32, #tpu.memory_space<vmem>>, vector<1x4xf32>
      %cst_39 = arith.constant 0.899999976 : f32
      %48 = vector.broadcast %cst_39 : f32 to vector<1x4xf32>
      %49 = arith.mulf %48, %47 : vector<1x4xf32>
      %cst_40 = arith.constant 1.000000e-01 : f32
      %50 = vector.broadcast %cst_40 : f32 to vector<1x4xf32>
      %51 = arith.mulf %50, %29 : vector<1x4xf32>
      %52 = arith.addf %49, %51 : vector<1x4xf32>
      %c0_41 = arith.constant 0 : index
      %c0_42 = arith.constant 0 : index
      %53 = vector.load %arg10[%c0_41, %c0_42] : memref<1x4xf32, #tpu.memory_space<vmem>>, vector<1x4xf32>
      tpu.vector_store %arg10[%c0_41, %c0_42], %52 {strides = array<i32>} : memref<1x4xf32, #tpu.memory_space<vmem>>, vector<1x4xf32>,
    } else {
    }
    return
  }
  func.func @transform_0(%arg0: i32, %arg1: i32) -> (i32, i32, i32) {
    %c0_i32 = arith.constant 0 : i32
    %c0_i32_0 = arith.constant 0 : i32
    return %arg0, %c0_i32, %arg1 : i32, i32, i32
  }
  func.func @transform_1(%arg0: i32, %arg1: i32) -> (i32, i32) {
    %c0_i32 = arith.constant 0 : i32
    %c0_i32_0 = arith.constant 0 : i32
    %c0_i32_1 = arith.constant 0 : i32
    return %c0_i32, %c0_i32_0 : i32, i32
  }
  func.func @transform_2(%arg0: i32, %arg1: i32) -> (i32, i32) {
    %c0_i32 = arith.constant 0 : i32
    %c0_i32_0 = arith.constant 0 : i32
    %c0_i32_1 = arith.constant 0 : i32
    return %c0_i32, %c0_i32_0 : i32, i32
  }
  func.func @transform_3(%arg0: i32, %arg1: i32) -> (i32, i32) {
    %c0_i32 = arith.constant 0 : i32
    %c0_i32_0 = arith.constant 0 : i32
    %c0_i32_1 = arith.constant 0 : i32
    return %c0_i32, %c0_i32_0 : i32, i32
  }
  func.func @transform_4(%arg0: i32, %arg1: i32) -> (i32, i32) {
    %c0_i32 = arith.constant 0 : i32
    %c0_i32_0 = arith.constant 0 : i32
    %c0_i32_1 = arith.constant 0 : i32
    return %c0_i32, %c0_i32_0 : i32, i32
  }
  func.func @transform_5(%arg0: i32, %arg1: i32) -> (i32, i32) {
    %c0_i32 = arith.constant 0 : i32
    %c0_i32_0 = arith.constant 0 : i32
    %c0_i32_1 = arith.constant 0 : i32
    return %c0_i32, %c0_i32_0 : i32, i32
  }
  func.func @transform_6(%arg0: i32, %arg1: i32) -> (i32, i32) {
    %c0_i32 = arith.constant 0 : i32
    %c0_i32_0 = arith.constant 0 : i32
    %c0_i32_1 = arith.constant 0 : i32
    return %c0_i32, %c0_i32_0 : i32, i32
  }
  func.func @transform_7(%arg0: i32, %arg1: i32) -> (i32, i32) {
    %c0_i32 = arith.constant 0 : i32
    %c0_i32_0 = arith.constant 0 : i32
    %c0_i32_1 = arith.constant 0 : i32
    return %c0_i32, %c0_i32_0 : i32, i32
  }
  func.func @transform_8(%arg0: i32, %arg1: i32) -> (i32, i32) {
    %c0_i32 = arith.constant 0 : i32
    %c0_i32_0 = arith.constant 0 : i32
    %c0_i32_1 = arith.constant 0 : i32
    return %c0_i32, %c0_i32_0 : i32, i32
  }
}

</mosaic_0001>

<llo_original>
// kernel: tpu_custom_call.1
$region0: #{tpu_custom_call.1}
  #allocation0 [shape = 'u32[]', space=smem, size = 0x4, offset = 0x4, fixed_abs, tag = 'smem constant byte address 0x4 - core index']
  #allocation1 [shape = 'u32[144,128]{1,0:T(1,128)}', space=vmem, size = 0x12000, scoped, tag = 'internal scratch']
  #allocation2 [shape = 'f32[1,4]{1,0:T(1,128)}', space=vmem, size = 0x200, scoped, tag = 'scratch operand']
  #allocation3 [shape = 'f32[1,4]{1,0:T(1,128)}', space=vmem, size = 0x200, scoped, tag = 'scratch operand']
  %s0 = inlined_call_operand.hbm [shape: f32[2,4,256], index: 0, kind: input, shape index: {}]
  %s1 = inlined_call_operand.vmem [shape: f32[1,4], index: 1, kind: input, shape index: {}]
  %s2 = inlined_call_operand.vmem [shape: f32[1,4], index: 2, kind: input, shape index: {}]
  %s3 = inlined_call_operand.vmem [shape: f32[1,4], index: 3, kind: input, shape index: {}]
  %s4 = inlined_call_operand.vmem [shape: f32[1,4], index: 4, kind: input, shape index: {}]
  %s5 = inlined_call_operand.hbm [shape: f32[1,4], index: 5, kind: output, shape index: {0}]
  %s6 = inlined_call_operand.hbm [shape: f32[1,4], index: 6, kind: output, shape index: {1}]
  %s7 = inlined_call_operand.hbm [shape: f32[1,4], index: 7, kind: output, shape index: {2}]
  %s8 = inlined_call_operand.hbm [shape: f32[1,4], index: 8, kind: output, shape index: {3}]
  %9 = xla_tuple %s5, %s6, %s7, %s8
  %s10 = sld [smem:[#allocation0]]
  $region89: #{tpu_custom_call.1} parent=0
    _
  %s12 = ssub.s32 1, %s10
  %s13 = scalar_select 0, %s12, %s10
  $region1: #{tpu_custom_call.1} parent=0
    #allocation4 [shape = 'u8[8192]{0}', space=vmem, size = 0x2000, scoped, tag = 'input window, operand 0']
    #allocation5 [shape = 's32[2]{0}', space=sflag, size = 0x8, scoped, tag = 'scoped memory for tpu_custom_call.1']
    #allocation6 [shape = 's32[2]{0}', space=sflag, size = 0x8, scoped, tag = 'scoped memory for tpu_custom_call.1']
    #allocation7 [shape = 'u8[512]{0}', space=vmem, size = 0x400, scoped, tag = 'output window, operand 0, single buffered']
    #allocation8 [shape = 'u8[512]{0}', space=vmem, size = 0x400, scoped, tag = 'output window, operand 1, single buffered']
    #allocation9 [shape = 's32[1]{0}', space=sflag, size = 0x4, scoped, tag = 'scoped memory for tpu_custom_call.1']
    #allocation10 [shape = 'u8[512]{0}', space=vmem, size = 0x400, scoped, tag = 'output window, operand 2, single buffered']
    #allocation11 [shape = 'u8[512]{0}', space=vmem, size = 0x400, scoped, tag = 'output window, operand 3, single buffered']
    #allocation12 [shape = 's32[1]{0}', space=sflag, size = 0x4, scoped, tag = 'scoped memory for tpu_custom_call.1']
    %14 = vsyncpa [#allocation5], 0
    %s15 = scalar_lea.sflag [#allocation5], 1
    %16 = vsyncpa %s15, 0
    %17 = vsyncpa [#allocation6], 0
    %18 = vsyncpa [#allocation9], 0
    %19 = vsyncpa [#allocation12], 0
    loop: start=0, step=1, limit=4
    $region2: #{tpu_custom_call.1} parent=1 // loop_pre_header
      _
    $region3: #{tpu_custom_call.1} parent=1 // loop_header
      %s21 = sphi 0, %s25
      %p22 = scmp.ge.s32.totalorder %s21, 4
      %s28 = sphi 0, %s40
      %s29 = sphi 0, %s36
      %s30 = sphi 0, %s28
      %s31 = sphi 0, %s29
      %s32 = sphi 0, %s30
      %s33 = sphi 0, %s31
      %s45 = sphi 0, %s47
      %s48 = sphi 0, %s45
      %s49 = sphi 0, %s48
      %s65 = sphi 0, %s49
      %s69 = sphi 0, %s69
      %s71 = sphi 0, %s69
      %s72 = sphi 0, %s71
      %s86 = sphi 0, %s72
      %s90 = sphi 0, %s90
      %s92 = sphi 0, %s90
      %s93 = sphi 0, %s92
      %s107 = sphi 0, %s93
      %s111 = sphi 0, %s111
      %s113 = sphi 0, %s111
      %s114 = sphi 0, %s113
      %s128 = sphi 0, %s114
      %s132 = sphi 0, %s132
      %s134 = sphi 0, %s132
      %s135 = sphi 0, %s134
      %s149 = sphi 0, %s135
      %s153 = sphi 0, %s153
      %s155 = sphi 0, %s153
      %s156 = sphi 0, %s155
      %s170 = sphi 0, %s156
      %s174 = sphi 0, %s174
      %s176 = sphi 0, %s174
      %s177 = sphi 0, %s176
      %s191 = sphi 0, %s177
      %s195 = sphi 0, %s195
      %s197 = sphi 0, %s195
      %s198 = sphi 0, %s197
      %s212 = sphi 0, %s198
      %s216 = sphi 0, %s216
      %s218 = sphi 0, %s216
      %s219 = sphi 0, %s218
      %s233 = sphi 0, %s219
    $region4: #{tpu_custom_call.1} parent=1 // loop_header_branch
      %24 = sbr.rel (%p22) target = $region8
    $region5: #{tpu_custom_call.1} parent=1 // loop_body
      %s26 = ssub.s32 %s21, 1
      %s27 = ssub.s32 %s21, 2
      %s34 = sadd.s32 1, %s29
      %p35 = scmp.ge.s32.totalorder %s34, 1
      %s36 = scalar_select %p35, 0, %s34
      %s37 = sadd.s32 1, %s28
      %s38 = scalar_select %p35, %s37, %s28
      %p39 = scmp.ge.s32.totalorder %s38, 2
      %s40 = scalar_select %p39, 0, %s38
      %s41 = ssub.s32 %s28, %s40
      %s42 = ssub.s32 %s29, %s36
      %s43 = sor.u32 %s41, %s42
      %p44 = scmp.eq.s32.totalorder %s43, 0
      %s46 = sadd.s32 %s45, 1
      %s47 = scalar_select %p44, %s45, %s46
      %p50 = pneg %p44
      %p51 = scmp.eq.s32.totalorder %s21, 1
      %p52 = por %p50, %p51
      %p53 = scmp.ne.s32.totalorder %s45, %s48
      %p54 = scmp.eq.s32.totalorder %s21, 0
      %p55 = por %p53, %p54
      %p56 = scmp.ne.s32.totalorder %s45, %s48
      %p57 = scmp.eq.s32.totalorder %s26, 1
      %p58 = por %p56, %p57
      %p59 = scmp.ne.s32.totalorder %s48, %s49
      %p60 = scmp.eq.s32.totalorder %s26, 0
      %p61 = por %p59, %p60
      %p62 = scmp.ne.s32.totalorder %s48, %s49
      %p63 = scmp.eq.s32.totalorder %s27, 1
      %p64 = por %p62, %p63
      %p66 = scmp.ne.s32.totalorder %s49, %s65
      %p67 = scmp.eq.s32.totalorder %s27, 0
      %p68 = por %p66, %p67
      %s70 = sadd.s32 %s69, 1
      %p73 = scmp.eq.s32.totalorder %s21, 1
      %p74 = scmp.ne.s32.totalorder %s69, %s71
      %p75 = scmp.eq.s32.totalorder %s21, 0
      %p76 = por %p74, %p75
      %p77 = scmp.ne.s32.totalorder %s69, %s71
      %p78 = scmp.eq.s32.totalorder %s26, 1
      %p79 = por %p77, %p78
      %p80 = scmp.ne.s32.totalorder %s71, %s72
      %p81 = scmp.eq.s32.totalorder %s26, 0
      %p82 = por %p80, %p81
      %p83 = scmp.ne.s32.totalorder %s71, %s72
      %p84 = scmp.eq.s32.totalorder %s27, 1
      %p85 = por %p83, %p84
      %p87 = scmp.ne.s32.totalorder %s72, %s86
      %p88 = scmp.eq.s32.totalorder %s27, 0
      %p89 = por %p87, %p88
      %s91 = sadd.s32 %s90, 1
      %p94 = scmp.eq.s32.totalorder %s21, 1
      %p95 = scmp.ne.s32.totalorder %s90, %s92
      %p96 = scmp.eq.s32.totalorder %s21, 0
      %p97 = por %p95, %p96
      %p98 = scmp.ne.s32.totalorder %s90, %s92
      %p99 = scmp.eq.s32.totalorder %s26, 1
      %p100 = por %p98, %p99
      %p101 = scmp.ne.s32.totalorder %s92, %s93
      %p102 = scmp.eq.s32.totalorder %s26, 0
      %p103 = por %p101, %p102
      %p104 = scmp.ne.s32.totalorder %s92, %s93
      %p105 = scmp.eq.s32.totalorder %s27, 1
      %p106 = por %p104, %p105
      %p108 = scmp.ne.s32.totalorder %s93, %s107
      %p109 = scmp.eq.s32.totalorder %s27, 0
      %p110 = por %p108, %p109
      %s112 = sadd.s32 %s111, 1
      %p115 = scmp.eq.s32.totalorder %s21, 1
      %p116 = scmp.ne.s32.totalorder %s111, %s113
      %p117 = scmp.eq.s32.totalorder %s21, 0
      %p118 = por %p116, %p117
      %p119 = scmp.ne.s32.totalorder %s111, %s113
      %p120 = scmp.eq.s32.totalorder %s26, 1
      %p121 = por %p119, %p120
      %p122 = scmp.ne.s32.totalorder %s113, %s114
      %p123 = scmp.eq.s32.totalorder %s26, 0
      %p124 = por %p122, %p123
      %p125 = scmp.ne.s32.totalorder %s113, %s114
      %p126 = scmp.eq.s32.totalorder %s27, 1
      %p127 = por %p125, %p126
      %p129 = scmp.ne.s32.totalorder %s114, %s128
      %p130 = scmp.eq.s32.totalorder %s27, 0
      %p131 = por %p129, %p130
      %s133 = sadd.s32 %s132, 1
      %p136 = scmp.eq.s32.totalorder %s21, 1
      %p137 = scmp.ne.s32.totalorder %s132, %s134
      %p138 = scmp.eq.s32.totalorder %s21, 0
      %p139 = por %p137, %p138
      %p140 = scmp.ne.s32.totalorder %s132, %s134
      %p141 = scmp.eq.s32.totalorder %s26, 1
      %p142 = por %p140, %p141
      %p143 = scmp.ne.s32.totalorder %s134, %s135
      %p144 = scmp.eq.s32.totalorder %s26, 0
      %p145 = por %p143, %p144
      %p146 = scmp.ne.s32.totalorder %s134, %s135
      %p147 = scmp.eq.s32.totalorder %s27, 1
      %p148 = por %p146, %p147
      %p150 = scmp.ne.s32.totalorder %s135, %s149
      %p151 = scmp.eq.s32.totalorder %s27, 0
      %p152 = por %p150, %p151
      %s154 = sadd.s32 %s153, 1
      %p157 = scmp.eq.s32.totalorder %s21, 1
      %p158 = scmp.ne.s32.totalorder %s153, %s155
      %p159 = scmp.eq.s32.totalorder %s21, 0
      %p160 = por %p158, %p159
      %p161 = scmp.ne.s32.totalorder %s153, %s155
      %p162 = scmp.eq.s32.totalorder %s26, 1
      %p163 = por %p161, %p162
      %p164 = scmp.ne.s32.totalorder %s155, %s156
      %p165 = scmp.eq.s32.totalorder %s26, 0
      %p166 = por %p164, %p165
      %p167 = scmp.ne.s32.totalorder %s155, %s156
      %p168 = scmp.eq.s32.totalorder %s27, 1
      %p169 = por %p167, %p168
      %p171 = scmp.ne.s32.totalorder %s156, %s170
      %p172 = scmp.eq.s32.totalorder %s27, 0
      %p173 = por %p171, %p172
      %s175 = sadd.s32 %s174, 1
      %p178 = scmp.eq.s32.totalorder %s21, 1
      %p179 = scmp.ne.s32.totalorder %s174, %s176
      %p180 = scmp.eq.s32.totalorder %s21, 0
      %p181 = por %p179, %p180
      %p182 = scmp.ne.s32.totalorder %s174, %s176
      %p183 = scmp.eq.s32.totalorder %s26, 1
      %p184 = por %p182, %p183
      %p185 = scmp.ne.s32.totalorder %s176, %s177
      %p186 = scmp.eq.s32.totalorder %s26, 0
      %p187 = por %p185, %p186
      %p188 = scmp.ne.s32.totalorder %s176, %s177
      %p189 = scmp.eq.s32.totalorder %s27, 1
      %p190 = por %p188, %p189
      %p192 = scmp.ne.s32.totalorder %s177, %s191
      %p193 = scmp.eq.s32.totalorder %s27, 0
      %p194 = por %p192, %p193
      %s196 = sadd.s32 %s195, 1
      %p199 = scmp.eq.s32.totalorder %s21, 1
      %p200 = scmp.ne.s32.totalorder %s195, %s197
      %p201 = scmp.eq.s32.totalorder %s21, 0
      %p202 = por %p200, %p201
      %p203 = scmp.ne.s32.totalorder %s195, %s197
      %p204 = scmp.eq.s32.totalorder %s26, 1
      %p205 = por %p203, %p204
      %p206 = scmp.ne.s32.totalorder %s197, %s198
      %p207 = scmp.eq.s32.totalorder %s26, 0
      %p208 = por %p206, %p207
      %p209 = scmp.ne.s32.totalorder %s197, %s198
      %p210 = scmp.eq.s32.totalorder %s27, 1
      %p211 = por %p209, %p210
      %p213 = scmp.ne.s32.totalorder %s198, %s212
      %p214 = scmp.eq.s32.totalorder %s27, 0
      %p215 = por %p213, %p214
      %s217 = sadd.s32 %s216, 1
      %p220 = scmp.eq.s32.totalorder %s21, 1
      %p221 = scmp.ne.s32.totalorder %s216, %s218
      %p222 = scmp.eq.s32.totalorder %s21, 0
      %p223 = por %p221, %p222
      %p224 = scmp.ne.s32.totalorder %s216, %s218
      %p225 = scmp.eq.s32.totalorder %s26, 1
      %p226 = por %p224, %p225
      %p227 = scmp.ne.s32.totalorder %s218, %s219
      %p228 = scmp.eq.s32.totalorder %s26, 0
      %p229 = por %p227, %p228
      %p230 = scmp.ne.s32.totalorder %s218, %s219
      %p231 = scmp.eq.s32.totalorder %s27, 1
      %p232 = por %p230, %p231
      %p234 = scmp.ne.s32.totalorder %s219, %s233
      %p235 = scmp.eq.s32.totalorder %s27, 0
      %p236 = por %p234, %p235
      %p237 = scmp.le.s32.totalorder 1, %s21
      %p238 = scmp.lt.s32.totalorder %s21, 3
      %p239 = pnand %p237, %p238
      %p240 = pneg %p239
      // Predicated region
      $region9: #{tpu_custom_call.1} parent=5 // pred_check
        _
      $region10: #{tpu_custom_call.1} parent=5 // pred_check_branch
        %242 = sbr.rel (%p239) target = $region12
      $region11: #{tpu_custom_call.1} parent=5 // pred_region
        %s243 = ssub.s32 %s21, 1
        // Predicated region
        $region13: #{tpu_custom_call.1} parent=11 // pred_check
          %p244 = pneg %p82
        $region14: #{tpu_custom_call.1} parent=11 // pred_check_branch
          %246 = sbr.rel (%p244) target = $region16
        $region15: #{tpu_custom_call.1} parent=11 // pred_region
          _
        $region16: #{tpu_custom_call.1} parent=11 // pred_fallthru
          _
        // Predicated region
        $region17: #{tpu_custom_call.1} parent=11 // pred_check
          %p247 = pneg %p103
        $region18: #{tpu_custom_call.1} parent=11 // pred_check_branch
          %249 = sbr.rel (%p247) target = $region20
        $region19: #{tpu_custom_call.1} parent=11 // pred_region
          _
        $region20: #{tpu_custom_call.1} parent=11 // pred_fallthru
          _
        // Predicated region
        $region21: #{tpu_custom_call.1} parent=11 // pred_check
          %p250 = pneg %p124
        $region22: #{tpu_custom_call.1} parent=11 // pred_check_branch
          %252 = sbr.rel (%p250) target = $region24
        $region23: #{tpu_custom_call.1} parent=11 // pred_region
          _
        $region24: #{tpu_custom_call.1} parent=11 // pred_fallthru
          _
        // Predicated region
        $region25: #{tpu_custom_call.1} parent=11 // pred_check
          %p253 = pneg %p145
        $region26: #{tpu_custom_call.1} parent=11 // pred_check_branch
          %255 = sbr.rel (%p253) target = $region28
        $region27: #{tpu_custom_call.1} parent=11 // pred_region
          _
        $region28: #{tpu_custom_call.1} parent=11 // pred_fallthru
          _
      $region12: #{tpu_custom_call.1} parent=5 // pred_fallthru
        _
      %p256 = scmp.lt.s32.totalorder %s21, 2
      // Predicated region
      $region29: #{tpu_custom_call.1} parent=5 // pred_check
        %p257 = pneg %p256
      $region30: #{tpu_custom_call.1} parent=5 // pred_check_branch
        %259 = sbr.rel (%p257) target = $region32
      $region31: #{tpu_custom_call.1} parent=5 // pred_region
        // Predicated region
        $region33: #{tpu_custom_call.1} parent=31 // pred_check
          %p260 = pneg %p55
        $region34: #{tpu_custom_call.1} parent=31 // pred_check_branch
          %262 = sbr.rel (%p260) target = $region36
        $region35: #{tpu_custom_call.1} parent=31 // pred_region
          %s263 = sand.u32 %s45, 1
          %s264 = scalar_lea.sflag [#allocation5], %s263
          %s265 = sand.u32 %s45, 1
          %s266 = smul.addr %s265, 8
          %s267 = scalar_lea.vmem [#allocation4], %s266
          %s268 = smul.u32 2, %s29
          %s270 = ssub.s32 128, 128
          %271 = vsyncadd %s264, %s270
          %s272 = smul.addr %s28, 2
          %s273 = sadd.s32 %s268, %s272
          %s274 = smul.addr %s273, 64
          %s275 = scalar_lea.hbm %s0, %s274
          %s277 = sshll.u32 %s267, 4
          %s278 = int_to_ptr.vmem [resolvable:$true] %s277
          %280 = dma.hbm_to_vmem [thread:$0]  %s275, 128, %s278, %s264
        $region36: #{tpu_custom_call.1} parent=31 // pred_fallthru
          _
      $region32: #{tpu_custom_call.1} parent=5 // pred_fallthru
        _
      %p281 = scmp.le.s32.totalorder 1, %s21
      %p282 = scmp.lt.s32.totalorder %s21, 3
      %p283 = pnand %p281, %p282
      %p284 = pneg %p283
      // Predicated region
      $region37: #{tpu_custom_call.1} parent=5 // pred_check
        _
      $region38: #{tpu_custom_call.1} parent=5 // pred_check_branch
        %286 = sbr.rel (%p283) target = $region40
      $region39: #{tpu_custom_call.1} parent=5 // pred_region
        %s287 = ssub.s32 %s21, 1
        %s288 = sand.u32 %s48, 1
        %s289 = scalar_lea.sflag [#allocation5], %s288
        %s290 = sand.u32 %s48, 1
        %s291 = smul.addr %s290, 8
        %s292 = scalar_lea.vmem [#allocation4], %s291
        // Predicated region
        $region41: #{tpu_custom_call.1} parent=39 // pred_check
          %p293 = pneg %p61
        $region42: #{tpu_custom_call.1} parent=39 // pred_check_branch
          %295 = sbr.rel (%p293) target = $region44
        $region43: #{tpu_custom_call.1} parent=39 // pred_region
          %296 = dma.done %s289, 128
        $region44: #{tpu_custom_call.1} parent=39 // pred_fallthru
          _
        %s297 = sand.u32 %s48, 1
        %s298 = scalar_lea.sflag [#allocation5], %s297
        %s299 = sand.u32 %s48, 1
        %s300 = smul.addr %s299, 8
        %s301 = scalar_lea.vmem [#allocation4], %s300
        %p302 = pneg %p61
        %p303 = pneg %p58
        %p304 = pneg %p82
        %p305 = pneg %p79
        %p306 = pneg %p103
        %p307 = pneg %p100
        %p308 = pneg %p124
        %p309 = pneg %p121
        %p310 = pneg %p145
        %p311 = pneg %p142
        %p312 = pneg %p166
        %p313 = pneg %p163
        %p314 = pneg %p187
        %p315 = pneg %p184
        %p316 = pneg %p208
        %p317 = pneg %p205
        %p318 = pneg %p229
        %p319 = pneg %p226
        %s320 = smul.u32 2, %s31
        %p321 = scmp.eq.s32.totalorder %s30, 0
        %p322 = scmp.eq.s32.totalorder %s31, 0
        %p323 = pnand %p321, %p322
        %p324 = pneg %p323
        // Predicated region
        $region45: #{tpu_custom_call.1} parent=39 // pred_check
          _
        $region46: #{tpu_custom_call.1} parent=39 // pred_check_branch
          %326 = sbr.rel (%p323) target = $region48
        $region47: #{tpu_custom_call.1} parent=39 // pred_region
          %vm327 = vcmask 24576
          %328 = vst.msk [vmem:[#allocation2] sm:$0x1] %vm327, 0.0
          %329 = vst.msk [vmem:[#allocation3] sm:$0x1] %vm327, 0.0
        $region48: #{tpu_custom_call.1} parent=39 // pred_fallthru
          _
        %v330 = vld [vmem:[%s292] sm:$0xff]
        %v331 = vld [vmem:[#allocation2] sm:$0x1]
        %v333 = vcombine.high %v330, %v330
        %vm335 = vcmask 1043456
        %v336 = vsel %vm335, %v330, 0.0
        %v337 = vsel %vm335, %v333, 0.0
        %v338 = vadd.f32 %v336, %v337
        %339 = vadd.xlane.f32.xlu0 %v338
        %v340 = vpop.xlane.xlu0 %339
        %v342 = vlaneseq
        %v343 = vshrl.u32 %v342, 7
        %v344 = vsub.s32 0, %v343
        %v345 = vrot.slane %v340, %v344
        %v346 = vlaneseq
        %v347 = vshrl.u32 %v346, 7
        %v348 = vsub.s32 1, %v347
        %v349 = vrot.slane %v340, %v348
        %v350 = vlaneseq
        %v351 = vshrl.u32 %v350, 7
        %v352 = vsub.s32 2, %v351
        %v353 = vrot.slane %v340, %v352
        %v354 = vlaneseq
        %v355 = vshrl.u32 %v354, 7
        %v356 = vsub.s32 3, %v355
        %v357 = vrot.slane %v340, %v356
        %v358 = vcombine.low %v345, %v349
        %v359 = vcombine.low %v353, %v357
        %v361 = vunpack.c.l.s4 1966171168
        %v362 = vunpack.c.0.s8 %v361
        %v363 = vlaneseq
        %v364 = vshrl.u32 %v363, 7
        %v365 = vsub.s32 %v362, %v364
        %v366 = vrot.slane %v358, %v365
        %v368 = vunpack.c.l.s4 1966171168
        %v369 = vunpack.c.0.s8 %v368
        %v370 = vlaneseq
        %v371 = vshrl.u32 %v370, 7
        %v372 = vsub.s32 %v369, %v371
        %v373 = vrot.slane %v359, %v372
        %v374 = vcombine.low %v366, %v373
        %v376 = vunpack.c.l.s4 1966171168
        %v377 = vunpack.c.0.s8 %v376
        %v378 = vlaneseq
        %v379 = vshrl.u32 %v378, 7
        %v380 = vsub.s32 %v377, %v379
        %v381 = vrot.slane %v374, %v380
        %382 = vset.pattern.permute.xlu0 0
        %383 = vperm.xlu0 %382, %v381
        %v384 = vpop.permute.xlu0 %383
        %v385 = vlaneseq
        %v386 = vand.u32 %v385, 127
        %v387 = vlaneseq
        %v388 = vshrl.u32 %v387, 7
        %v389 = vsub.s32 %v386, %v388
        %v390 = vrot.slane %v384, %v389
        %v392 = vunpack.c.l.s4 1966171168
        %v393 = vunpack.c.0.s8 %v392
        %v394 = vlaneseq
        %v395 = vshrl.u32 %v394, 7
        %v396 = vsub.s32 %v393, %v395
        %v397 = vrot.slane %v390, %v396
        %v399 = vunpack.c.l.s4 1966171168
        %v400 = vunpack.c.0.s8 %v399
        %v401 = vlaneseq
        %v402 = vshrl.u32 %v401, 7
        %v403 = vsub.s32 %v400, %v402
        %v404 = vrot.slane %v397, %v403
        %v406 = vadd.f32 %v331, %v404
        %vm407 = vcmask 24576
        %408 = vst.msk [vmem:[#allocation2] sm:$0x1] %vm407, %v406
        %v409 = vld [vmem:[#allocation3] sm:$0x1]
        %v410 = vmul.f32 %v330, %v330
        %v412 = vcombine.high %v410, %v410
        %v414 = vsel %vm335, %v410, 0.0
        %v415 = vsel %vm335, %v412, 0.0
        %v416 = vadd.f32 %v414, %v415
        %417 = vadd.xlane.f32.xlu0 %v416
        %v418 = vpop.xlane.xlu0 %417
        %v420 = vlaneseq
        %v421 = vshrl.u32 %v420, 7
        %v422 = vsub.s32 0, %v421
        %v423 = vrot.slane %v418, %v422
        %v424 = vlaneseq
        %v425 = vshrl.u32 %v424, 7
        %v426 = vsub.s32 1, %v425
        %v427 = vrot.slane %v418, %v426
        %v428 = vlaneseq
        %v429 = vshrl.u32 %v428, 7
        %v430 = vsub.s32 2, %v429
        %v431 = vrot.slane %v418, %v430
        %v432 = vlaneseq
        %v433 = vshrl.u32 %v432, 7
        %v434 = vsub.s32 3, %v433
        %v435 = vrot.slane %v418, %v434
        %v436 = vcombine.low %v423, %v427
        %v437 = vcombine.low %v431, %v435
        %v439 = vunpack.c.l.s4 1966171168
        %v440 = vunpack.c.0.s8 %v439
        %v441 = vlaneseq
        %v442 = vshrl.u32 %v441, 7
        %v443 = vsub.s32 %v440, %v442
        %v444 = vrot.slane %v436, %v443
        %v446 = vunpack.c.l.s4 1966171168
        %v447 = vunpack.c.0.s8 %v446
        %v448 = vlaneseq
        %v449 = vshrl.u32 %v448, 7
        %v450 = vsub.s32 %v447, %v449
        %v451 = vrot.slane %v437, %v450
        %v452 = vcombine.low %v444, %v451
        %v454 = vunpack.c.l.s4 1966171168
        %v455 = vunpack.c.0.s8 %v454
        %v456 = vlaneseq
        %v457 = vshrl.u32 %v456, 7
        %v458 = vsub.s32 %v455, %v457
        %v459 = vrot.slane %v452, %v458
        %460 = vset.pattern.permute.xlu0 0
        %461 = vperm.xlu0 %460, %v459
        %v462 = vpop.permute.xlu0 %461
        %v463 = vlaneseq
        %v464 = vshrl.u32 %v463, 7
        %v465 = vsub.s32 %v386, %v464
        %v466 = vrot.slane %v462, %v465
        %v468 = vunpack.c.l.s4 1966171168
        %v469 = vunpack.c.0.s8 %v468
        %v470 = vlaneseq
        %v471 = vshrl.u32 %v470, 7
        %v472 = vsub.s32 %v469, %v471
        %v473 = vrot.slane %v466, %v472
        %v475 = vunpack.c.l.s4 1966171168
        %v476 = vunpack.c.0.s8 %v475
        %v477 = vlaneseq
        %v478 = vshrl.u32 %v477, 7
        %v479 = vsub.s32 %v476, %v478
        %v480 = vrot.slane %v473, %v479
        %v482 = vadd.f32 %v409, %v480
        %483 = vst.msk [vmem:[#allocation3] sm:$0x1] %vm407, %v482
        %p484 = scmp.eq.s32.totalorder %s30, 1
        %p485 = pnand %p484, %p322
        %p486 = pneg %p485
        // Predicated region
        $region49: #{tpu_custom_call.1} parent=39 // pred_check
          _
        $region50: #{tpu_custom_call.1} parent=39 // pred_check_branch
          %488 = sbr.rel (%p485) target = $region52
        $region51: #{tpu_custom_call.1} parent=39 // pred_region
          %v489 = vld [vmem:[#allocation2] sm:$0x1]
          %v490 = vmul.f32 %v489, 0.001953125
          %v491 = vld [vmem:[#allocation3] sm:$0x1]
          %v492 = vmul.f32 %v491, 0.001953125
          %v493 = vmul.f32 %v490, %v490
          %v494 = vsub.f32 %v492, %v493
          %v495 = vmax.f32 %v494, 0.0
          %v496 = vadd.f32 %v495, 1e-05
          %v497 = vrsqrt.pop %v496
          %v498 = vld [vmem:[%s1] sm:$0x1]
          %v499 = vmul.f32 %v498, %v497
          %500 = vst.msk [vmem:[#allocation7] sm:$0x1] %vm407, %v499
          %v501 = vld [vmem:[%s2] sm:$0x1]
          %v502 = vmul.f32 %v490, %v499
          %v503 = vsub.f32 %v501, %v502
          %504 = vst.msk [vmem:[#allocation8] sm:$0x1] %vm407, %v503
          %v505 = vld [vmem:[%s3] sm:$0x1]
          %v506 = vmul.f32 %v505, 0.9
          %v507 = vmul.f32 %v490, 0.1
          %v508 = vadd.f32 %v506, %v507
          %509 = vst.msk [vmem:[#allocation10] sm:$0x1] %vm407, %v508
          %v510 = vld [vmem:[%s4] sm:$0x1]
          %v511 = vmul.f32 %v510, 0.9
          %v512 = vmul.f32 %v495, 0.1
          %v513 = vadd.f32 %v511, %v512
          %514 = vst.msk [vmem:[#allocation11] sm:$0x1] %vm407, %v513
        $region52: #{tpu_custom_call.1} parent=39 // pred_fallthru
          _
        // Predicated region
        $region53: #{tpu_custom_call.1} parent=39 // pred_check
          %p515 = pneg %p163
        $region54: #{tpu_custom_call.1} parent=39 // pred_check_branch
          %517 = sbr.rel (%p515) target = $region56
        $region55: #{tpu_custom_call.1} parent=39 // pred_region
          %s519 = ssub.s32 16, 16
          %520 = vsyncadd [#allocation6], %s519
          %s522 = sshll.u32 [#allocation7], 4
          %s523 = int_to_ptr.vmem [resolvable:$true] %s522
          %525 = dma.vmem_to_hbm [thread:$0]  %s523, 16, %s5, [#allocation6]
        $region56: #{tpu_custom_call.1} parent=39 // pred_fallthru
          _
        // Predicated region
        $region57: #{tpu_custom_call.1} parent=39 // pred_check
          %p526 = pneg %p184
        $region58: #{tpu_custom_call.1} parent=39 // pred_check_branch
          %528 = sbr.rel (%p526) target = $region60
        $region59: #{tpu_custom_call.1} parent=39 // pred_region
          %s530 = ssub.s32 16, 16
          %531 = vsyncadd [#allocation9], %s530
          %s533 = sshll.u32 [#allocation8], 4
          %s534 = int_to_ptr.vmem [resolvable:$true] %s533
          %536 = dma.vmem_to_hbm [thread:$0]  %s534, 16, %s6, [#allocation9]
        $region60: #{tpu_custom_call.1} parent=39 // pred_fallthru
          _
        // Predicated region
        $region61: #{tpu_custom_call.1} parent=39 // pred_check
          %p537 = pneg %p205
        $region62: #{tpu_custom_call.1} parent=39 // pred_check_branch
          %539 = sbr.rel (%p537) target = $region64
        $region63: #{tpu_custom_call.1} parent=39 // pred_region
          %s541 = ssub.s32 16, 16
          %542 = vsyncadd [#allocation9], %s541
          %s544 = sshll.u32 [#allocation10], 4
          %s545 = int_to_ptr.vmem [resolvable:$true] %s544
          %547 = dma.vmem_to_hbm [thread:$0]  %s545, 16, %s7, [#allocation9]
        $region64: #{tpu_custom_call.1} parent=39 // pred_fallthru
          _
        // Predicated region
        $region65: #{tpu_custom_call.1} parent=39 // pred_check
          %p548 = pneg %p226
        $region66: #{tpu_custom_call.1} parent=39 // pred_check_branch
          %550 = sbr.rel (%p548) target = $region68
        $region67: #{tpu_custom_call.1} parent=39 // pred_region
          %s552 = ssub.s32 16, 16
          %553 = vsyncadd [#allocation12], %s552
          %s555 = sshll.u32 [#allocation11], 4
          %s556 = int_to_ptr.vmem [resolvable:$true] %s555
          %558 = dma.vmem_to_hbm [thread:$0]  %s556, 16, %s8, [#allocation12]
        $region68: #{tpu_custom_call.1} parent=39 // pred_fallthru
          _
        // Predicated region
        $region69: #{tpu_custom_call.1} parent=39 // pred_check
          %p559 = pneg %p163
        $region70: #{tpu_custom_call.1} parent=39 // pred_check_branch
          %561 = sbr.rel (%p559) target = $region72
        $region71: #{tpu_custom_call.1} parent=39 // pred_region
          %562 = dma.done [#allocation6], 16
        $region72: #{tpu_custom_call.1} parent=39 // pred_fallthru
          _
        // Predicated region
        $region73: #{tpu_custom_call.1} parent=39 // pred_check
          %p563 = pneg %p184
        $region74: #{tpu_custom_call.1} parent=39 // pred_check_branch
          %565 = sbr.rel (%p563) target = $region76
        $region75: #{tpu_custom_call.1} parent=39 // pred_region
          %566 = dma.done [#allocation9], 16
        $region76: #{tpu_custom_call.1} parent=39 // pred_fallthru
          _
        // Predicated region
        $region77: #{tpu_custom_call.1} parent=39 // pred_check
          %p567 = pneg %p205
        $region78: #{tpu_custom_call.1} parent=39 // pred_check_branch
          %569 = sbr.rel (%p567) target = $region80
        $region79: #{tpu_custom_call.1} parent=39 // pred_region
          %570 = dma.done [#allocation9], 16
        $region80: #{tpu_custom_call.1} parent=39 // pred_fallthru
          _
        // Predicated region
        $region81: #{tpu_custom_call.1} parent=39 // pred_check
          %p571 = pneg %p226
        $region82: #{tpu_custom_call.1} parent=39 // pred_check_branch
          %573 = sbr.rel (%p571) target = $region84
        $region83: #{tpu_custom_call.1} parent=39 // pred_region
          %574 = dma.done [#allocation12], 16
        $region84: #{tpu_custom_call.1} parent=39 // pred_fallthru
          _
      $region40: #{tpu_custom_call.1} parent=5 // pred_fallthru
        _
      %p575 = scmp.le.s32.totalorder 2, %s21
      // Predicated region
      $region85: #{tpu_custom_call.1} parent=5 // pred_check
        %p576 = pneg %p575
      $region86: #{tpu_custom_call.1} parent=5 // pred_check_branch
        %578 = sbr.rel (%p576) target = $region88
      $region87: #{tpu_custom_call.1} parent=5 // pred_region
        %s579 = ssub.s32 %s21, 2
      $region88: #{tpu_custom_call.1} parent=5 // pred_fallthru
        _
    $region6: #{tpu_custom_call.1} parent=1 // loop_footer
      %s25 = sadd.s32 1, %s21
    $region7: #{tpu_custom_call.1} parent=1 // loop_footer_branch
      %20 = sbr.rel target = $region3
    $region8: #{tpu_custom_call.1} parent=1 // loop_exit
      _
    %580 = vsyncpa [#allocation5], 1
    %s581 = scalar_lea.sflag [#allocation5], 1
    %582 = vsyncpa %s581, 1
    %583 = vsyncpa [#allocation6], 1
    %s584 = scalar_lea.sflag [#allocation6], 1
    %585 = vsyncpa %s584, 1
    %586 = vsyncpa [#allocation9], 1
    %587 = vsyncpa [#allocation12], 1

</llo_original>
